<compile_context>
chip_gen: v7x
topology: tpu7x:2x2x1
jax: 0.10.0
libtpu: 0.0.40
codegen_flags: <defaults>
</compile_context>

<pallas_src>
import numpy as np
import jax
import jax.numpy as jnp
from jax import lax
from jax.experimental import pallas as pl
from jax.experimental.pallas import tpu as pltpu

LANE = 128
STRIP = 8                      # sublane rows folded per inner-loop step (1 f32 vreg)
MAX_BLOCK_BYTES = 4 << 20      # per-input, per-pipeline-buffer VMEM budget (4 MiB)
EPS = 1e-6

_FLOAT_DTYPES = (jnp.float32, jnp.bfloat16, jnp.float16)


def _min_sublane(dtype) -> int:
    # minimum sublane packing multiple: f32 -> 8, bf16/f16 -> 16, i8 -> 32
    return {4: 8, 2: 16, 1: 32}[jnp.dtype(dtype).itemsize]


def _make_kernel(rows: int, n_rows: int, k_total: int, k_per_split: int, ragged: bool):
    """rows: sublane rows per block (multiple of 8); n_rows: valid rows R;
    k_total: total number of row-blocks; k_per_split: k-extent of one grid split;
    ragged: last global block extends past R (unspecified reads -> masked)."""
    n_strips = rows // STRIP
    # pick an unroll factor that divides the trip count (keeps codegen simple)
    unroll = 1
    for u in (8, 4, 2):
        if n_strips % u == 0:
            unroll = u
            break

    def kernel(x_ref, t_ref, m_ref, out_ref):
        s = pl.program_id(1)
        k = pl.program_id(2)

        # zero the resident per-(batch, split) accumulator block at k == 0
        @pl.when(k == 0)
        def _():
            out_ref[...] = jnp.zeros(out_ref.shape, out_ref.dtype)

        g = s * k_per_split + k        # global row-block index
        row0 = g * rows                # first global sublane row of this block

        def accumulate(masked: bool):
            def step(i, acc):
                a0, a1, a2, a3, a4, a5 = acc
                r0 = pl.multiple_of(i * STRIP, STRIP)
                x = x_ref[pl.ds(r0, STRIP), :].astype(jnp.float32)
                t = t_ref[pl.ds(r0, STRIP), :].astype(jnp.float32)
                m = m_ref[pl.ds(r0, STRIP), :].astype(jnp.float32)
                if masked:
                    # Rows past n_rows are out-of-bounds reads (unspecified,
                    # possibly NaN) -> NaN-safe select-zero (not multiply).
                    ridx = lax.broadcasted_iota(jnp.int32, (STRIP, LANE), 0)
                    valid = (row0 + r0 + ridx) < n_rows
                    zero = jnp.zeros((), jnp.float32)
                    x = jnp.where(valid, x, zero)
                    t = jnp.where(valid, t, zero)
                    m = jnp.where(valid, m, zero)
                xm = x * m
                tm = t * m
                return (a0 + x * t,      # intersection_1 partials
                        a1 + x,          # sum(input)
                        a2 + t,          # sum(target)
                        a3 + xm * tm,    # intersection_2 partials
                        a4 + xm,         # sum(input * mask)
                        a5 + tm)         # sum(target_2)

            init = tuple(jnp.zeros((STRIP, LANE), jnp.float32) for _ in range(6))
            acc = lax.fori_loop(0, n_strips, step, init, unroll=unroll)
            for j in range(6):
                out_ref[j] += acc[j]

        if ragged:
            last = k_total - 1

            @pl.when(g == last)
            def _():
                accumulate(masked=True)

            @pl.when(g != last)
            def _():
                accumulate(masked=False)
        else:
            accumulate(masked=False)

    return kernel


def ponderated_dice_loss(inp, target, mask, *, max_block_rows: int = 1 << 30):
    """Returns (dice, dice_1, dice_2) exactly like the PyTorch module."""
    inp, target, mask = map(jnp.asarray, (inp, target, mask))
    assert inp.shape == target.shape == mask.shape, "input/target/mask shapes must match"
    B = inp.shape[0]
    N = int(np.prod(inp.shape[1:]))

    def norm_dtype(a):
        return a if a.dtype in _FLOAT_DTYPES else a.astype(jnp.float32)

    inp, target, mask = map(norm_dtype, (inp, target, mask))
    itemsizes = [jnp.dtype(a.dtype).itemsize for a in (inp, target, mask)]
    max_itemsize = max(itemsizes)
    sub = max(_min_sublane(a.dtype) for a in (inp, target, mask))
    chunk = sub * LANE

    # Pad (only when needed) ragged N up to a multiple of the packing chunk;
    # zero pad does not perturb any of the six sums.
    # TODO(synk): eliminate this full-array copy for non-aligned N by masking
    # the final 128-wide lane column in-kernel and feeding flat (B, N) inputs.
    P = ((N + chunk - 1) // chunk) * chunk

    def prep(a):
        a = a.reshape(B, N)
        if P != N:
            a = jnp.pad(a, ((0, 0), (0, P - N)))
        return a.reshape(B, P // LANE, LANE)

    xr, tr, mr = prep(inp), prep(target), prep(mask)
    R = P // LANE

    # Block-row selection: biggest block within the VMEM budget; prefer an exact
    # divisor of R so the ragged/masked path is never generated.
    rows_cap = min(R, int(max_block_rows), MAX_BLOCK_BYTES // (LANE * max_itemsize))
    rows_cap = max(sub, (rows_cap // sub) * sub)
    best = sub
    for cand in range(rows_cap, 0, -sub):
        if R % cand == 0:
            best = cand
            break
    if best * 4 >= rows_cap:          # good-enough divisor -> unmasked fast path
        rows, ragged = best, False
    else:                             # accept one masked (last) block instead
        rows, ragged = rows_cap, True
    KT = (R + rows - 1) // rows       # total row-blocks

    # v7x: when B is too small to feed both TensorCores, split the reduction
    # axis into 2 independent partial accumulators (summed below in XLA).
    S = 2 if (B == 1 and not ragged and KT % 2 == 0 and KT >= 2) else 1
    Kper = KT // S

    in_spec = pl.BlockSpec((None, rows, LANE), lambda b, s, k: (b, s * Kper + k, 0))
    out_spec = pl.BlockSpec((None, 6, 8, LANE), lambda b, s, k: (b * S + s, 0, 0, 0))

    in_block_bytes = rows * LANE * sum(itemsizes)
    out_block_bytes = 6 * 8 * LANE * 4
    vmem_limit = 2 * in_block_bytes + 2 * out_block_bytes + (4 << 20)
    vmem_limit = int(min(max(vmem_limit, 32 << 20), 100 << 20))

    cost = pl.CostEstimate(
        flops=int(10 * B * P),
        transcendentals=0,
        bytes_accessed=int(B * P * sum(itemsizes) + B * S * out_block_bytes),
    )

    parts = pl.pallas_call(
        _make_kernel(rows, R, KT, Kper, ragged),
        out_shape=jax.ShapeDtypeStruct((B * S, 6, 8, LANE), jnp.float32),
        grid_spec=pltpu.PrefetchScalarGridSpec(
            num_scalar_prefetch=0,
            grid=(B, S, Kper),
            in_specs=[in_spec, in_spec, in_spec],
            out_specs=out_spec,
        ),
        compiler_params=pltpu.CompilerParams(
            dimension_semantics=("parallel", "parallel", "arbitrary"),
            vmem_limit_bytes=vmem_limit,
        ),
        cost_estimate=cost,
    )(xr, tr, mr)

    # Tiny final combine in XLA: (B*S, 6, 8, 128) -> (B, 6) -> scalars.
    sums = jnp.sum(parts, axis=(2, 3)).reshape(B, S, 6).sum(axis=1)
    i1, sx, st, i2, sxm, stm = (sums[:, j] for j in range(6))
    dice_1 = jnp.mean(1.0 - (2.0 * i1 + EPS) / (sx + st + EPS))
    dice_2 = jnp.mean(1.0 - (2.0 * i2 + EPS) / (sxm + stm + EPS))
    return dice_1 + dice_2, dice_1, dice_2


def ponderated_dice_loss_ref(x, t, m):
    """Pure-JAX reference mirroring the PyTorch forward."""
    x = jnp.asarray(x, jnp.float32)
    t = jnp.asarray(t, jnp.float32)
    m = jnp.asarray(m, jnp.float32)
    axes = tuple(range(1, x.ndim))
    i1 = jnp.sum(x * t, axis=axes)
    u1 = jnp.sum(x, axis=axes) + jnp.sum(t, axis=axes)
    d1 = jnp.mean(1.0 - (2.0 * i1 + EPS) / (u1 + EPS))
    t2 = t * m
    i2 = jnp.sum(x * m * t2, axis=axes)
    u2 = jnp.sum(x * m, axis=axes) + jnp.sum(t2, axis=axes)
    d2 = jnp.mean(1.0 - (2.0 * i2 + EPS) / (u2 + EPS))
    return d1 + d2, d1, d2


def _check(shape, key, **kwargs):
    k1, k2, k3 = jax.random.split(key, 3)
    x = jax.random.uniform(k1, shape, dtype=jnp.float32)               # predictions in [0,1)
    t = (jax.random.uniform(k2, shape) > 0.5).astype(jnp.float32)      # binary target
    m = (jax.random.uniform(k3, shape) > 0.7).astype(jnp.float32)      # disconnection mask

    out = ponderated_dice_loss(x, t, m, **kwargs)
    jax.block_until_ready(out)
    ref = ponderated_dice_loss_ref(x, t, m)
    for got, want in zip(out, ref):
        np.testing.assert_allclose(np.array(got), np.array(want), rtol=1e-5, atol=1e-6)


if __name__ == "__main__":
    key = jax.random.PRNGKey(0)
    k1, k2, k3, k4 = jax.random.split(key, 4)

    # main case: typical NCHW usage, aligned N, single block, no pad
    _check((2, 4, 16, 16), k1)

    # ragged N (exercises the small lane-pad path)
    _check((2, 3, 20, 20), k2)

    # multi-block row axis with a ragged last block (exercises the pl.when-gated mask)
    _check((2, 1, 104, 128), k3, max_block_rows=64)

    # batch of 1 -> reduction axis split into 2 parallel partial accumulators
    _check((1, 4, 32, 64), k4, max_block_rows=16)

    print("KERNEL_OK")
</pallas_src>

<mosaic_0001>
module attributes {stable_mosaic.version = 11 : i64} {
  func.func @kernel(%arg0: i32, %arg1: i32, %arg2: i32, %arg3: memref<1x8x128xf32, #tpu.memory_space<vmem>>, %arg4: memref<1x8x128xf32, #tpu.memory_space<vmem>>, %arg5: memref<1x8x128xf32, #tpu.memory_space<vmem>>, %arg6: memref<1x6x8x128xf32, #tpu.memory_space<vmem>>) attributes {dimension_semantics = [#tpu.dimension_semantics<parallel>, #tpu.dimension_semantics<parallel>, #tpu.dimension_semantics<arbitrary>], iteration_bounds = array<i64: 2, 1, 1>, scalar_prefetch = 0 : i64, scratch_operands = 0 : i64, tpu.core_type = #tpu.core_type<tc>, window_params = [{transform_indices = @transform_0, window_bounds = array<i64: 1, 8, 128>}, {transform_indices = @transform_1, window_bounds = array<i64: 1, 8, 128>}, {transform_indices = @transform_2, window_bounds = array<i64: 1, 8, 128>}, {transform_indices = @transform_3, window_bounds = array<i64: 1, 6, 8, 128>}]} {
    %c0_i32 = arith.constant 0 : i32
    %0 = arith.cmpi eq, %arg2, %c0_i32 : i32
    %1 = arith.extui %0 : i1 to i32
    %c0_i32_0 = arith.constant 0 : i32
    %2 = arith.cmpi ne, %1, %c0_i32_0 : i32
    scf.if %2 {
      %cst_55 = arith.constant 0.000000e+00 : f32
      %66 = vector.broadcast %cst_55 : f32 to vector<6x8x128xf32>
      %c0_56 = arith.constant 0 : index
      %c0_57 = arith.constant 0 : index
      %c0_58 = arith.constant 0 : index
      %c0_59 = arith.constant 0 : index
      %67 = vector.load %arg6[%c0_56, %c0_57, %c0_58, %c0_59] : memref<1x6x8x128xf32, #tpu.memory_space<vmem>>, vector<1x6x8x128xf32>
      %68 = vector.shape_cast %67 : vector<1x6x8x128xf32> to vector<6x8x128xf32>
      %69 = vector.shape_cast %66 : vector<6x8x128xf32> to vector<1x6x8x128xf32>
      tpu.vector_store %arg6[%c0_56, %c0_57, %c0_58, %c0_59], %69 {strides = array<i32>} : memref<1x6x8x128xf32, #tpu.memory_space<vmem>>, vector<1x6x8x128xf32>,
    } else {
    }
    %cst = arith.constant 0.000000e+00 : f32
    %3 = vector.broadcast %cst : f32 to vector<8x128xf32>
    %cst_1 = arith.constant 0.000000e+00 : f32
    %4 = vector.broadcast %cst_1 : f32 to vector<8x128xf32>
    %cst_2 = arith.constant 0.000000e+00 : f32
    %5 = vector.broadcast %cst_2 : f32 to vector<8x128xf32>
    %cst_3 = arith.constant 0.000000e+00 : f32
    %6 = vector.broadcast %cst_3 : f32 to vector<8x128xf32>
    %cst_4 = arith.constant 0.000000e+00 : f32
    %7 = vector.broadcast %cst_4 : f32 to vector<8x128xf32>
    %cst_5 = arith.constant 0.000000e+00 : f32
    %8 = vector.broadcast %cst_5 : f32 to vector<8x128xf32>
    %c0_i32_6 = arith.constant 0 : i32
    %c8_i32 = arith.constant 8 : i32
    %9 = arith.muli %c0_i32_6, %c8_i32 : i32
    %10 = tpu.assume_multiple %9, 8 : i32
    %c0 = arith.constant 0 : index
    %11 = arith.index_cast %10 : i32 to index
    %c0_7 = arith.constant 0 : index
    %12 = vector.load %arg3[%c0, %11, %c0_7] : memref<1x8x128xf32, #tpu.memory_space<vmem>>, vector<1x8x128xf32>
    %13 = vector.shape_cast %12 : vector<1x8x128xf32> to vector<8x128xf32>
    %c0_8 = arith.constant 0 : index
    %14 = arith.index_cast %10 : i32 to index
    %c0_9 = arith.constant 0 : index
    %15 = vector.load %arg4[%c0_8, %14, %c0_9] : memref<1x8x128xf32, #tpu.memory_space<vmem>>, vector<1x8x128xf32>
    %16 = vector.shape_cast %15 : vector<1x8x128xf32> to vector<8x128xf32>
    %c0_10 = arith.constant 0 : index
    %17 = arith.index_cast %10 : i32 to index
    %c0_11 = arith.constant 0 : index
    %18 = vector.load %arg5[%c0_10, %17, %c0_11] : memref<1x8x128xf32, #tpu.memory_space<vmem>>, vector<1x8x128xf32>
    %19 = vector.shape_cast %18 : vector<1x8x128xf32> to vector<8x128xf32>
    %20 = arith.mulf %13, %19 : vector<8x128xf32>
    %21 = arith.mulf %16, %19 : vector<8x128xf32>
    %22 = arith.mulf %13, %16 : vector<8x128xf32>
    %23 = arith.addf %3, %22 : vector<8x128xf32>
    %24 = arith.addf %4, %13 : vector<8x128xf32>
    %25 = arith.addf %5, %16 : vector<8x128xf32>
    %26 = arith.mulf %20, %21 : vector<8x128xf32>
    %27 = arith.addf %6, %26 : vector<8x128xf32>
    %28 = arith.addf %7, %20 : vector<8x128xf32>
    %29 = arith.addf %8, %21 : vector<8x128xf32>
    %c1_i32 = arith.constant 1 : i32
    %c0_12 = arith.constant 0 : index
    %c0_13 = arith.constant 0 : index
    %c0_14 = arith.constant 0 : index
    %c0_15 = arith.constant 0 : index
    %30 = vector.load %arg6[%c0_12, %c0_13, %c0_14, %c0_15] : memref<1x6x8x128xf32, #tpu.memory_space<vmem>>, vector<1x1x8x128xf32>
    %31 = vector.shape_cast %30 : vector<1x1x8x128xf32> to vector<8x128xf32>
    %32 = arith.addf %31, %23 : vector<8x128xf32>
    %c0_16 = arith.constant 0 : index
    %c0_17 = arith.constant 0 : index
    %c0_18 = arith.constant 0 : index
    %c0_19 = arith.constant 0 : index
    %33 = vector.load %arg6[%c0_16, %c0_17, %c0_18, %c0_19] : memref<1x6x8x128xf32, #tpu.memory_space<vmem>>, vector<1x1x8x128xf32>
    %34 = vector.shape_cast %33 : vector<1x1x8x128xf32> to vector<8x128xf32>
    %35 = vector.shape_cast %32 : vector<8x128xf32> to vector<1x1x8x128xf32>
    tpu.vector_store %arg6[%c0_16, %c0_17, %c0_18, %c0_19], %35 {strides = array<i32>} : memref<1x6x8x128xf32, #tpu.memory_space<vmem>>, vector<1x1x8x128xf32>,
    %c0_20 = arith.constant 0 : index
    %c1 = arith.constant 1 : index
    %c0_21 = arith.constant 0 : index
    %c0_22 = arith.constant 0 : index
    %36 = vector.load %arg6[%c0_20, %c1, %c0_21, %c0_22] : memref<1x6x8x128xf32, #tpu.memory_space<vmem>>, vector<1x1x8x128xf32>
    %37 = vector.shape_cast %36 : vector<1x1x8x128xf32> to vector<8x128xf32>
    %38 = arith.addf %37, %24 : vector<8x128xf32>
    %c0_23 = arith.constant 0 : index
    %c1_24 = arith.constant 1 : index
    %c0_25 = arith.constant 0 : index
    %c0_26 = arith.constant 0 : index
    %39 = vector.load %arg6[%c0_23, %c1_24, %c0_25, %c0_26] : memref<1x6x8x128xf32, #tpu.memory_space<vmem>>, vector<1x1x8x128xf32>
    %40 = vector.shape_cast %39 : vector<1x1x8x128xf32> to vector<8x128xf32>
    %41 = vector.shape_cast %38 : vector<8x128xf32> to vector<1x1x8x128xf32>
    tpu.vector_store %arg6[%c0_23, %c1_24, %c0_25, %c0_26], %41 {strides = array<i32>} : memref<1x6x8x128xf32, #tpu.memory_space<vmem>>, vector<1x1x8x128xf32>,
    %c0_27 = arith.constant 0 : index
    %c2 = arith.constant 2 : index
    %c0_28 = arith.constant 0 : index
    %c0_29 = arith.constant 0 : index
    %42 = vector.load %arg6[%c0_27, %c2, %c0_28, %c0_29] : memref<1x6x8x128xf32, #tpu.memory_space<vmem>>, vector<1x1x8x128xf32>
    %43 = vector.shape_cast %42 : vector<1x1x8x128xf32> to vector<8x128xf32>
    %44 = arith.addf %43, %25 : vector<8x128xf32>
    %c0_30 = arith.constant 0 : index
    %c2_31 = arith.constant 2 : index
    %c0_32 = arith.constant 0 : index
    %c0_33 = arith.constant 0 : index
    %45 = vector.load %arg6[%c0_30, %c2_31, %c0_32, %c0_33] : memref<1x6x8x128xf32, #tpu.memory_space<vmem>>, vector<1x1x8x128xf32>
    %46 = vector.shape_cast %45 : vector<1x1x8x128xf32> to vector<8x128xf32>
    %47 = vector.shape_cast %44 : vector<8x128xf32> to vector<1x1x8x128xf32>
    tpu.vector_store %arg6[%c0_30, %c2_31, %c0_32, %c0_33], %47 {strides = array<i32>} : memref<1x6x8x128xf32, #tpu.memory_space<vmem>>, vector<1x1x8x128xf32>,
    %c0_34 = arith.constant 0 : index
    %c3 = arith.constant 3 : index
    %c0_35 = arith.constant 0 : index
    %c0_36 = arith.constant 0 : index
    %48 = vector.load %arg6[%c0_34, %c3, %c0_35, %c0_36] : memref<1x6x8x128xf32, #tpu.memory_space<vmem>>, vector<1x1x8x128xf32>
    %49 = vector.shape_cast %48 : vector<1x1x8x128xf32> to vector<8x128xf32>
    %50 = arith.addf %49, %27 : vector<8x128xf32>
    %c0_37 = arith.constant 0 : index
    %c3_38 = arith.constant 3 : index
    %c0_39 = arith.constant 0 : index
    %c0_40 = arith.constant 0 : index
    %51 = vector.load %arg6[%c0_37, %c3_38, %c0_39, %c0_40] : memref<1x6x8x128xf32, #tpu.memory_space<vmem>>, vector<1x1x8x128xf32>
    %52 = vector.shape_cast %51 : vector<1x1x8x128xf32> to vector<8x128xf32>
    %53 = vector.shape_cast %50 : vector<8x128xf32> to vector<1x1x8x128xf32>
    tpu.vector_store %arg6[%c0_37, %c3_38, %c0_39, %c0_40], %53 {strides = array<i32>} : memref<1x6x8x128xf32, #tpu.memory_space<vmem>>, vector<1x1x8x128xf32>,
    %c0_41 = arith.constant 0 : index
    %c4 = arith.constant 4 : index
    %c0_42 = arith.constant 0 : index
    %c0_43 = arith.constant 0 : index
    %54 = vector.load %arg6[%c0_41, %c4, %c0_42, %c0_43] : memref<1x6x8x128xf32, #tpu.memory_space<vmem>>, vector<1x1x8x128xf32>
    %55 = vector.shape_cast %54 : vector<1x1x8x128xf32> to vector<8x128xf32>
    %56 = arith.addf %55, %28 : vector<8x128xf32>
    %c0_44 = arith.constant 0 : index
    %c4_45 = arith.constant 4 : index
    %c0_46 = arith.constant 0 : index
    %c0_47 = arith.constant 0 : index
    %57 = vector.load %arg6[%c0_44, %c4_45, %c0_46, %c0_47] : memref<1x6x8x128xf32, #tpu.memory_space<vmem>>, vector<1x1x8x128xf32>
    %58 = vector.shape_cast %57 : vector<1x1x8x128xf32> to vector<8x128xf32>
    %59 = vector.shape_cast %56 : vector<8x128xf32> to vector<1x1x8x128xf32>
    tpu.vector_store %arg6[%c0_44, %c4_45, %c0_46, %c0_47], %59 {strides = array<i32>} : memref<1x6x8x128xf32, #tpu.memory_space<vmem>>, vector<1x1x8x128xf32>,
    %c0_48 = arith.constant 0 : index
    %c5 = arith.constant 5 : index
    %c0_49 = arith.constant 0 : index
    %c0_50 = arith.constant 0 : index
    %60 = vector.load %arg6[%c0_48, %c5, %c0_49, %c0_50] : memref<1x6x8x128xf32, #tpu.memory_space<vmem>>, vector<1x1x8x128xf32>
    %61 = vector.shape_cast %60 : vector<1x1x8x128xf32> to vector<8x128xf32>
    %62 = arith.addf %61, %29 : vector<8x128xf32>
    %c0_51 = arith.constant 0 : index
    %c5_52 = arith.constant 5 : index
    %c0_53 = arith.constant 0 : index
    %c0_54 = arith.constant 0 : index
    %63 = vector.load %arg6[%c0_51, %c5_52, %c0_53, %c0_54] : memref<1x6x8x128xf32, #tpu.memory_space<vmem>>, vector<1x1x8x128xf32>
    %64 = vector.shape_cast %63 : vector<1x1x8x128xf32> to vector<8x128xf32>
    %65 = vector.shape_cast %62 : vector<8x128xf32> to vector<1x1x8x128xf32>
    tpu.vector_store %arg6[%c0_51, %c5_52, %c0_53, %c0_54], %65 {strides = array<i32>} : memref<1x6x8x128xf32, #tpu.memory_space<vmem>>, vector<1x1x8x128xf32>,
    return
  }
  func.func @transform_0(%arg0: i32, %arg1: i32, %arg2: i32) -> (i32, i32, i32) {
    %c1_i32 = arith.constant 1 : i32
    %0 = arith.muli %arg1, %c1_i32 : i32
    %1 = arith.addi %0, %arg2 : i32
    %c0_i32 = arith.constant 0 : i32
    %c0_i32_0 = arith.constant 0 : i32
    return %arg0, %1, %c0_i32 : i32, i32, i32
  }
  func.func @transform_1(%arg0: i32, %arg1: i32, %arg2: i32) -> (i32, i32, i32) {
    %c1_i32 = arith.constant 1 : i32
    %0 = arith.muli %arg1, %c1_i32 : i32
    %1 = arith.addi %0, %arg2 : i32
    %c0_i32 = arith.constant 0 : i32
    %c0_i32_0 = arith.constant 0 : i32
    return %arg0, %1, %c0_i32 : i32, i32, i32
  }
  func.func @transform_2(%arg0: i32, %arg1: i32, %arg2: i32) -> (i32, i32, i32) {
    %c1_i32 = arith.constant 1 : i32
    %0 = arith.muli %arg1, %c1_i32 : i32
    %1 = arith.addi %0, %arg2 : i32
    %c0_i32 = arith.constant 0 : i32
    %c0_i32_0 = arith.constant 0 : i32
    return %arg0, %1, %c0_i32 : i32, i32, i32
  }
  func.func @transform_3(%arg0: i32, %arg1: i32, %arg2: i32) -> (i32, i32, i32, i32) {
    %c1_i32 = arith.constant 1 : i32
    %0 = arith.muli %arg0, %c1_i32 : i32
    %1 = arith.addi %0, %arg1 : i32
    %c0_i32 = arith.constant 0 : i32
    %c0_i32_0 = arith.constant 0 : i32
    %c0_i32_1 = arith.constant 0 : i32
    %c0_i32_2 = arith.constant 0 : i32
    return %1, %c0_i32, %c0_i32_0, %c0_i32_1 : i32, i32, i32, i32
  }
}

</mosaic_0001>

<llo_original>
// kernel: tpu_custom_call.1
$region0: #{tpu_custom_call.1}
  #allocation0 [shape = 'u32[]', space=smem, size = 0x4, offset = 0x4, fixed_abs, tag = 'smem constant byte address 0x4 - core index']
  #allocation1 [shape = 'u32[144,128]{1,0:T(1,128)}', space=vmem, size = 0x12000, scoped, tag = 'internal scratch']
  %s0 = inlined_call_operand.hbm [shape: f32[2,8,128], index: 0, kind: input, shape index: {}]
  %s1 = inlined_call_operand.hbm [shape: f32[2,8,128], index: 1, kind: input, shape index: {}]
  %s2 = inlined_call_operand.hbm [shape: f32[2,8,128], index: 2, kind: input, shape index: {}]
  %s3 = inlined_call_operand.hbm [shape: f32[2,6,8,128], index: 3, kind: output, shape index: {}]
  %s4 = sld [smem:[#allocation0]]
  $region61: #{tpu_custom_call.1} parent=0
    _
  %s6 = ssub.s32 1, %s4
  %s7 = scalar_select 0, %s6, %s4
  $region1: #{tpu_custom_call.1} parent=0
    #allocation2 [shape = 'u8[8192]{0}', space=vmem, size = 0x2000, scoped, tag = 'input window, operand 0']
    #allocation3 [shape = 's32[2]{0}', space=sflag, size = 0x8, scoped, tag = 'scoped memory for tpu_custom_call.1']
    #allocation4 [shape = 's32[2]{0}', space=sflag, size = 0x8, scoped, tag = 'scoped memory for tpu_custom_call.1']
    #allocation5 [shape = 'u8[8192]{0}', space=vmem, size = 0x2000, scoped, tag = 'input window, operand 1']
    #allocation6 [shape = 's32[2]{0}', space=sflag, size = 0x8, scoped, tag = 'scoped memory for tpu_custom_call.1']
    #allocation7 [shape = 'u8[8192]{0}', space=vmem, size = 0x2000, scoped, tag = 'input window, operand 2']
    #allocation8 [shape = 'u8[49152]{0}', space=vmem, size = 0xc000, scoped, tag = 'output window, operand 0']
    %8 = vsyncpa [#allocation3], 0
    %s9 = scalar_lea.sflag [#allocation3], 1
    %10 = vsyncpa %s9, 0
    %11 = vsyncpa [#allocation6], 0
    %s12 = scalar_lea.sflag [#allocation6], 1
    %13 = vsyncpa %s12, 0
    %14 = vsyncpa [#allocation4], 0
    %s15 = scalar_lea.sflag [#allocation4], 1
    %16 = vsyncpa %s15, 0
    loop: start=0, step=1, limit=4
    $region2: #{tpu_custom_call.1} parent=1 // loop_pre_header
      _
    $region3: #{tpu_custom_call.1} parent=1 // loop_header
      %s18 = sphi 0, %s22
      %p19 = scmp.ge.s32.totalorder %s18, 4
      %s25 = sphi 0, %s44
      %s26 = sphi 0, %s40
      %s27 = sphi 0, %s36
      %s28 = sphi 0, %s25
      %s29 = sphi 0, %s26
      %s30 = sphi 0, %s27
      %s31 = sphi 0, %s28
      %s32 = sphi 0, %s29
      %s33 = sphi 0, %s30
      %s51 = sphi 0, %s53
      %s54 = sphi 0, %s51
      %s55 = sphi 0, %s54
      %s71 = sphi 0, %s55
      %s81 = sphi 0, %s83
      %s84 = sphi 0, %s81
      %s85 = sphi 0, %s84
      %s101 = sphi 0, %s85
      %s111 = sphi 0, %s113
      %s114 = sphi 0, %s111
      %s115 = sphi 0, %s114
      %s131 = sphi 0, %s115
      %s139 = sphi 0, %s141
      %s142 = sphi 0, %s139
      %s143 = sphi 0, %s142
      %s159 = sphi 0, %s143
    $region4: #{tpu_custom_call.1} parent=1 // loop_header_branch
      %21 = sbr.rel (%p19) target = $region8
    $region5: #{tpu_custom_call.1} parent=1 // loop_body
      %s23 = ssub.s32 %s18, 1
      %s24 = ssub.s32 %s18, 2
      %s34 = sadd.s32 1, %s27
      %p35 = scmp.ge.s32.totalorder %s34, 1
      %s36 = scalar_select %p35, 0, %s34
      %s37 = sadd.s32 1, %s26
      %s38 = scalar_select %p35, %s37, %s26
      %p39 = scmp.ge.s32.totalorder %s38, 1
      %s40 = scalar_select %p39, 0, %s38
      %s41 = sadd.s32 1, %s25
      %s42 = scalar_select %p39, %s41, %s25
      %p43 = scmp.ge.s32.totalorder %s42, 2
      %s44 = scalar_select %p43, 0, %s42
      %s45 = sadd.s32 %s26, %s27
      %s46 = sadd.s32 %s40, %s36
      %s47 = ssub.s32 %s25, %s44
      %s48 = ssub.s32 %s45, %s46
      %s49 = sor.u32 %s47, %s48
      %p50 = scmp.eq.s32.totalorder %s49, 0
      %s52 = sadd.s32 %s51, 1
      %s53 = scalar_select %p50, %s51, %s52
      %p56 = pneg %p50
      %p57 = scmp.eq.s32.totalorder %s18, 1
      %p58 = por %p56, %p57
      %p59 = scmp.ne.s32.totalorder %s51, %s54
      %p60 = scmp.eq.s32.totalorder %s18, 0
      %p61 = por %p59, %p60
      %p62 = scmp.ne.s32.totalorder %s51, %s54
      %p63 = scmp.eq.s32.totalorder %s23, 1
      %p64 = por %p62, %p63
      %p65 = scmp.ne.s32.totalorder %s54, %s55
      %p66 = scmp.eq.s32.totalorder %s23, 0
      %p67 = por %p65, %p66
      %p68 = scmp.ne.s32.totalorder %s54, %s55
      %p69 = scmp.eq.s32.totalorder %s24, 1
      %p70 = por %p68, %p69
      %p72 = scmp.ne.s32.totalorder %s55, %s71
      %p73 = scmp.eq.s32.totalorder %s24, 0
      %p74 = por %p72, %p73
      %s75 = sadd.s32 %s26, %s27
      %s76 = sadd.s32 %s40, %s36
      %s77 = ssub.s32 %s25, %s44
      %s78 = ssub.s32 %s75, %s76
      %s79 = sor.u32 %s77, %s78
      %p80 = scmp.eq.s32.totalorder %s79, 0
      %s82 = sadd.s32 %s81, 1
      %s83 = scalar_select %p80, %s81, %s82
      %p86 = pneg %p80
      %p87 = scmp.eq.s32.totalorder %s18, 1
      %p88 = por %p86, %p87
      %p89 = scmp.ne.s32.totalorder %s81, %s84
      %p90 = scmp.eq.s32.totalorder %s18, 0
      %p91 = por %p89, %p90
      %p92 = scmp.ne.s32.totalorder %s81, %s84
      %p93 = scmp.eq.s32.totalorder %s23, 1
      %p94 = por %p92, %p93
      %p95 = scmp.ne.s32.totalorder %s84, %s85
      %p96 = scmp.eq.s32.totalorder %s23, 0
      %p97 = por %p95, %p96
      %p98 = scmp.ne.s32.totalorder %s84, %s85
      %p99 = scmp.eq.s32.totalorder %s24, 1
      %p100 = por %p98, %p99
      %p102 = scmp.ne.s32.totalorder %s85, %s101
      %p103 = scmp.eq.s32.totalorder %s24, 0
      %p104 = por %p102, %p103
      %s105 = sadd.s32 %s26, %s27
      %s106 = sadd.s32 %s40, %s36
      %s107 = ssub.s32 %s25, %s44
      %s108 = ssub.s32 %s105, %s106
      %s109 = sor.u32 %s107, %s108
      %p110 = scmp.eq.s32.totalorder %s109, 0
      %s112 = sadd.s32 %s111, 1
      %s113 = scalar_select %p110, %s111, %s112
      %p116 = pneg %p110
      %p117 = scmp.eq.s32.totalorder %s18, 1
      %p118 = por %p116, %p117
      %p119 = scmp.ne.s32.totalorder %s111, %s114
      %p120 = scmp.eq.s32.totalorder %s18, 0
      %p121 = por %p119, %p120
      %p122 = scmp.ne.s32.totalorder %s111, %s114
      %p123 = scmp.eq.s32.totalorder %s23, 1
      %p124 = por %p122, %p123
      %p125 = scmp.ne.s32.totalorder %s114, %s115
      %p126 = scmp.eq.s32.totalorder %s23, 0
      %p127 = por %p125, %p126
      %p128 = scmp.ne.s32.totalorder %s114, %s115
      %p129 = scmp.eq.s32.totalorder %s24, 1
      %p130 = por %p128, %p129
      %p132 = scmp.ne.s32.totalorder %s115, %s131
      %p133 = scmp.eq.s32.totalorder %s24, 0
      %p134 = por %p132, %p133
      %s135 = sadd.s32 %s25, %s26
      %s136 = sadd.s32 %s44, %s40
      %s137 = ssub.s32 %s135, %s136
      %p138 = scmp.eq.s32.totalorder %s137, 0
      %s140 = sadd.s32 %s139, 1
      %s141 = scalar_select %p138, %s139, %s140
      %p144 = pneg %p138
      %p145 = scmp.eq.s32.totalorder %s18, 1
      %p146 = por %p144, %p145
      %p147 = scmp.ne.s32.totalorder %s139, %s142
      %p148 = scmp.eq.s32.totalorder %s18, 0
      %p149 = por %p147, %p148
      %p150 = scmp.ne.s32.totalorder %s139, %s142
      %p151 = scmp.eq.s32.totalorder %s23, 1
      %p152 = por %p150, %p151
      %p153 = scmp.ne.s32.totalorder %s142, %s143
      %p154 = scmp.eq.s32.totalorder %s23, 0
      %p155 = por %p153, %p154
      %p156 = scmp.ne.s32.totalorder %s142, %s143
      %p157 = scmp.eq.s32.totalorder %s24, 1
      %p158 = por %p156, %p157
      %p160 = scmp.ne.s32.totalorder %s143, %s159
      %p161 = scmp.eq.s32.totalorder %s24, 0
      %p162 = por %p160, %p161
      %p163 = scmp.le.s32.totalorder 1, %s18
      %p164 = scmp.lt.s32.totalorder %s18, 3
      %p165 = pnand %p163, %p164
      %p166 = pneg %p165
      // Predicated region
      $region9: #{tpu_custom_call.1} parent=5 // pred_check
        _
      $region10: #{tpu_custom_call.1} parent=5 // pred_check_branch
        %168 = sbr.rel (%p165) target = $region12
      $region11: #{tpu_custom_call.1} parent=5 // pred_region
        %s169 = ssub.s32 %s18, 1
      $region12: #{tpu_custom_call.1} parent=5 // pred_fallthru
        _
      %p170 = scmp.lt.s32.totalorder %s18, 2
      // Predicated region
      $region13: #{tpu_custom_call.1} parent=5 // pred_check
        %p171 = pneg %p170
      $region14: #{tpu_custom_call.1} parent=5 // pred_check_branch
        %173 = sbr.rel (%p171) target = $region16
      $region15: #{tpu_custom_call.1} parent=5 // pred_region
        // Predicated region
        $region17: #{tpu_custom_call.1} parent=15 // pred_check
          %p174 = pneg %p61
        $region18: #{tpu_custom_call.1} parent=15 // pred_check_branch
          %176 = sbr.rel (%p174) target = $region20
        $region19: #{tpu_custom_call.1} parent=15 // pred_region
          %s177 = sand.u32 %s51, 1
          %s178 = scalar_lea.sflag [#allocation3], %s177
          %s179 = sand.u32 %s51, 1
          %s180 = smul.addr %s179, 8
          %s181 = scalar_lea.vmem [#allocation2], %s180
          %s182 = sadd.s32 %s26, %s27
          %s184 = ssub.s32 128, 128
          %185 = vsyncadd %s178, %s184
          %s186 = sadd.s32 %s182, %s25
          %s187 = smul.addr %s186, 128
          %s188 = scalar_lea.hbm %s0, %s187
          %s190 = sshll.u32 %s181, 4
          %s191 = int_to_ptr.vmem [resolvable:$true] %s190
          %193 = dma.hbm_to_vmem [thread:$0]  %s188, 128, %s191, %s178
        $region20: #{tpu_custom_call.1} parent=15 // pred_fallthru
          _
        // Predicated region
        $region21: #{tpu_custom_call.1} parent=15 // pred_check
          %p194 = pneg %p91
        $region22: #{tpu_custom_call.1} parent=15 // pred_check_branch
          %196 = sbr.rel (%p194) target = $region24
        $region23: #{tpu_custom_call.1} parent=15 // pred_region
          %s197 = sand.u32 %s18, 1
          %s198 = scalar_lea.sflag [#allocation6], %s197
          %s199 = sand.u32 %s81, 1
          %s200 = smul.addr %s199, 8
          %s201 = scalar_lea.vmem [#allocation5], %s200
          %s202 = sadd.s32 %s26, %s27
          %s204 = ssub.s32 128, 128
          %205 = vsyncadd %s198, %s204
          %s206 = sadd.s32 %s202, %s25
          %s207 = smul.addr %s206, 128
          %s208 = scalar_lea.hbm %s1, %s207
          %s210 = sshll.u32 %s201, 4
          %s211 = int_to_ptr.vmem [resolvable:$true] %s210
          %213 = dma.hbm_to_vmem [thread:$0]  %s208, 128, %s211, %s198
        $region24: #{tpu_custom_call.1} parent=15 // pred_fallthru
          _
        // Predicated region
        $region25: #{tpu_custom_call.1} parent=15 // pred_check
          %p214 = pneg %p121
        $region26: #{tpu_custom_call.1} parent=15 // pred_check_branch
          %216 = sbr.rel (%p214) target = $region28
        $region27: #{tpu_custom_call.1} parent=15 // pred_region
          %s217 = sand.u32 %s18, 1
          %s218 = scalar_lea.sflag [#allocation6], %s217
          %s219 = sand.u32 %s111, 1
          %s220 = smul.addr %s219, 8
          %s221 = scalar_lea.vmem [#allocation7], %s220
          %s222 = sadd.s32 %s26, %s27
          %s224 = ssub.s32 128, 128
          %225 = vsyncadd %s218, %s224
          %s226 = sadd.s32 %s222, %s25
          %s227 = smul.addr %s226, 128
          %s228 = scalar_lea.hbm %s2, %s227
          %s230 = sshll.u32 %s221, 4
          %s231 = int_to_ptr.vmem [resolvable:$true] %s230
          %233 = dma.hbm_to_vmem [thread:$0]  %s228, 128, %s231, %s218
        $region28: #{tpu_custom_call.1} parent=15 // pred_fallthru
          _
      $region16: #{tpu_custom_call.1} parent=5 // pred_fallthru
        _
      %p234 = scmp.le.s32.totalorder 1, %s18
      %p235 = scmp.lt.s32.totalorder %s18, 3
      %p236 = pnand %p234, %p235
      %p237 = pneg %p236
      // Predicated region
      $region29: #{tpu_custom_call.1} parent=5 // pred_check
        _
      $region30: #{tpu_custom_call.1} parent=5 // pred_check_branch
        %239 = sbr.rel (%p236) target = $region32
      $region31: #{tpu_custom_call.1} parent=5 // pred_region
        %s240 = ssub.s32 %s18, 1
        %s241 = sand.u32 %s54, 1
        %s242 = scalar_lea.sflag [#allocation3], %s241
        %s243 = sand.u32 %s54, 1
        %s244 = smul.addr %s243, 8
        %s245 = scalar_lea.vmem [#allocation2], %s244
        // Predicated region
        $region33: #{tpu_custom_call.1} parent=31 // pred_check
          %p246 = pneg %p67
        $region34: #{tpu_custom_call.1} parent=31 // pred_check_branch
          %248 = sbr.rel (%p246) target = $region36
        $region35: #{tpu_custom_call.1} parent=31 // pred_region
          %249 = dma.done %s242, 128
        $region36: #{tpu_custom_call.1} parent=31 // pred_fallthru
          _
        %s250 = sand.u32 %s23, 1
        %s251 = scalar_lea.sflag [#allocation6], %s250
        %s252 = sand.u32 %s84, 1
        %s253 = smul.addr %s252, 8
        %s254 = scalar_lea.vmem [#allocation5], %s253
        // Predicated region
        $region37: #{tpu_custom_call.1} parent=31 // pred_check
          %p255 = pneg %p97
        $region38: #{tpu_custom_call.1} parent=31 // pred_check_branch
          %257 = sbr.rel (%p255) target = $region40
        $region39: #{tpu_custom_call.1} parent=31 // pred_region
          %258 = dma.done %s251, 128
        $region40: #{tpu_custom_call.1} parent=31 // pred_fallthru
          _
        %s259 = sand.u32 %s23, 1
        %s260 = scalar_lea.sflag [#allocation6], %s259
        %s261 = sand.u32 %s114, 1
        %s262 = smul.addr %s261, 8
        %s263 = scalar_lea.vmem [#allocation7], %s262
        // Predicated region
        $region41: #{tpu_custom_call.1} parent=31 // pred_check
          %p264 = pneg %p127
        $region42: #{tpu_custom_call.1} parent=31 // pred_check_branch
          %266 = sbr.rel (%p264) target = $region44
        $region43: #{tpu_custom_call.1} parent=31 // pred_region
          %267 = dma.done %s260, 128
        $region44: #{tpu_custom_call.1} parent=31 // pred_fallthru
          _
        %s268 = sand.u32 %s54, 1
        %s269 = scalar_lea.sflag [#allocation3], %s268
        %s270 = sand.u32 %s54, 1
        %s271 = smul.addr %s270, 8
        %s272 = scalar_lea.vmem [#allocation2], %s271
        %p273 = pneg %p67
        %p274 = pneg %p64
        %s275 = sand.u32 %s23, 1
        %s276 = scalar_lea.sflag [#allocation6], %s275
        %s277 = sand.u32 %s84, 1
        %s278 = smul.addr %s277, 8
        %s279 = scalar_lea.vmem [#allocation5], %s278
        %p280 = pneg %p97
        %p281 = pneg %p94
        %s282 = sand.u32 %s23, 1
        %s283 = scalar_lea.sflag [#allocation6], %s282
        %s284 = sand.u32 %s114, 1
        %s285 = smul.addr %s284, 8
        %s286 = scalar_lea.vmem [#allocation7], %s285
        %p287 = pneg %p127
        %p288 = pneg %p124
        %p289 = pneg %p155
        %p290 = pneg %p152
        %s291 = sand.u32 %s142, 1
        %s292 = scalar_lea.sflag [#allocation4], %s291
        %s293 = sand.u32 %s142, 1
        %s294 = smul.addr %s293, 48
        %s295 = scalar_lea.vmem [#allocation8], %s294
        %s296 = sadd.s32 %s29, %s30
        %s297 = sadd.s32 %s29, %s30
        %s298 = sadd.s32 %s29, %s30
        %s299 = sadd.s32 %s28, %s29
        %p300 = scmp.eq.s32.totalorder %s30, 0
        // Predicated region
        $region45: #{tpu_custom_call.1} parent=31 // pred_check
          %p301 = pneg %p300
        $region46: #{tpu_custom_call.1} parent=31 // pred_check_branch
          %303 = sbr.rel (%p301) target = $region48
        $region47: #{tpu_custom_call.1} parent=31 // pred_region
          %304 = vst [vmem:[%s295] sm:$0xff] 0.0
          %305 = vst [vmem:[%s295 + $0x8] sm:$0xff] 0.0
          %306 = vst [vmem:[%s295 + $0x10] sm:$0xff] 0.0
          %307 = vst [vmem:[%s295 + $0x18] sm:$0xff] 0.0
          %308 = vst [vmem:[%s295 + $0x20] sm:$0xff] 0.0
          %309 = vst [vmem:[%s295 + $0x28] sm:$0xff] 0.0
        $region48: #{tpu_custom_call.1} parent=31 // pred_fallthru
          _
        %v310 = vld [vmem:[%s245] sm:$0xff]
        %v311 = vld [vmem:[%s254] sm:$0xff]
        %v312 = vld [vmem:[%s263] sm:$0xff]
        %v313 = vmul.f32 %v310, %v312
        %v314 = vmul.f32 %v311, %v312
        %v315 = vmul.f32 %v310, %v311
        %v316 = vadd.f32 %v315, 0.0
        %v317 = vadd.f32 %v310, 0.0
        %v318 = vadd.f32 %v311, 0.0
        %v319 = vmul.f32 %v313, %v314
        %v320 = vadd.f32 %v319, 0.0
        %v321 = vadd.f32 %v313, 0.0
        %v322 = vadd.f32 %v314, 0.0
        %v323 = vld [vmem:[%s295] sm:$0xff]
        %v324 = vadd.f32 %v323, %v316
        %325 = vst [vmem:[%s295] sm:$0xff] %v324
        %s326 = scalar_lea.vmem %s295, 8 [#allocation8]
        %v327 = vld [vmem:[%s326] sm:$0xff]
        %v328 = vadd.f32 %v327, %v317
        %329 = vst [vmem:[%s326] sm:$0xff] %v328
        %s330 = scalar_lea.vmem %s295, 16 [#allocation8]
        %v331 = vld [vmem:[%s330] sm:$0xff]
        %v332 = vadd.f32 %v331, %v318
        %333 = vst [vmem:[%s330] sm:$0xff] %v332
        %s334 = scalar_lea.vmem %s295, 24 [#allocation8]
        %v335 = vld [vmem:[%s334] sm:$0xff]
        %v336 = vadd.f32 %v335, %v320
        %337 = vst [vmem:[%s334] sm:$0xff] %v336
        %s338 = scalar_lea.vmem %s295, 32 [#allocation8]
        %v339 = vld [vmem:[%s338] sm:$0xff]
        %v340 = vadd.f32 %v339, %v321
        %341 = vst [vmem:[%s338] sm:$0xff] %v340
        %s342 = scalar_lea.vmem %s295, 40 [#allocation8]
        %v343 = vld [vmem:[%s342] sm:$0xff]
        %v344 = vadd.f32 %v343, %v322
        %345 = vst [vmem:[%s342] sm:$0xff] %v344
        %s346 = sand.u32 %s142, 1
        %s347 = scalar_lea.sflag [#allocation4], %s346
        %s348 = sand.u32 %s142, 1
        %s349 = smul.addr %s348, 48
        %s350 = scalar_lea.vmem [#allocation8], %s349
        // Predicated region
        $region49: #{tpu_custom_call.1} parent=31 // pred_check
          %p351 = pneg %p152
        $region50: #{tpu_custom_call.1} parent=31 // pred_check_branch
          %353 = sbr.rel (%p351) target = $region52
        $region51: #{tpu_custom_call.1} parent=31 // pred_region
          %s354 = sadd.s32 %s28, %s29
          %s356 = ssub.s32 768, 768
          %357 = vsyncadd %s347, %s356
          %s358 = smul.addr %s354, 6
          %s359 = smul.addr %s358, 128
          %s360 = scalar_lea.hbm %s3, %s359
          %s361 = sshll.u32 %s350, 4
          %s362 = int_to_ptr.vmem [resolvable:$true] %s361
          %367 = dma.vmem_to_hbm [thread:$0]  %s362, 768, %s360, %s347, 128, 128, 8
        $region52: #{tpu_custom_call.1} parent=31 // pred_fallthru
          _
      $region32: #{tpu_custom_call.1} parent=5 // pred_fallthru
        _
      %p368 = scmp.le.s32.totalorder 2, %s18
      // Predicated region
      $region53: #{tpu_custom_call.1} parent=5 // pred_check
        %p369 = pneg %p368
      $region54: #{tpu_custom_call.1} parent=5 // pred_check_branch
        %371 = sbr.rel (%p369) target = $region56
      $region55: #{tpu_custom_call.1} parent=5 // pred_region
        %s372 = ssub.s32 %s18, 2
        // Predicated region
        $region57: #{tpu_custom_call.1} parent=55 // pred_check
          %p373 = pneg %p158
        $region58: #{tpu_custom_call.1} parent=55 // pred_check_branch
          %375 = sbr.rel (%p373) target = $region60
        $region59: #{tpu_custom_call.1} parent=55 // pred_region
          %s376 = sand.u32 %s143, 1
          %s377 = scalar_lea.sflag [#allocation4], %s376
          %s378 = sand.u32 %s143, 1
          %s379 = smul.addr %s378, 48
          %s380 = scalar_lea.vmem [#allocation8], %s379
          %381 = dma.done %s377, 768
        $region60: #{tpu_custom_call.1} parent=55 // pred_fallthru
          _
      $region56: #{tpu_custom_call.1} parent=5 // pred_fallthru
        _
    $region6: #{tpu_custom_call.1} parent=1 // loop_footer
      %s22 = sadd.s32 1, %s18
    $region7: #{tpu_custom_call.1} parent=1 // loop_footer_branch
      %17 = sbr.rel target = $region3
    $region8: #{tpu_custom_call.1} parent=1 // loop_exit
      _
    %382 = vsyncpa [#allocation3], 1
    %s383 = scalar_lea.sflag [#allocation3], 1
    %384 = vsyncpa %s383, 1
    %385 = vsyncpa [#allocation6], 1
    %s386 = scalar_lea.sflag [#allocation6], 1
    %387 = vsyncpa %s386, 1
    %388 = vsyncpa [#allocation4], 1
    %s389 = scalar_lea.sflag [#allocation4], 1
    %390 = vsyncpa %s389, 1

</llo_original>
